<compile_context>
chip_gen: v7x
topology: tpu7x:2x2x1
jax: 0.10.0
libtpu: 0.0.40
codegen_flags: <defaults>
</compile_context>

<pallas_src>
import functools

import jax
import jax.numpy as jnp
from jax.experimental import pallas as pl
from jax.experimental.pallas import tpu as pltpu


def _round_up(x: int, m: int) -> int:
    return ((x + m - 1) // m) * m


def _vmem_limit_bytes() -> int:
    # ~3/4 of physical VMEM, capped at 96 MiB (-> ~96 MiB on v5e/v6e, ~48 MiB on v7x).
    try:
        cap = pltpu.get_tpu_info().vmem_capacity_bytes
        return int(min(cap * 3 // 4, 96 * 1024 * 1024))
    except Exception:
        return 32 * 1024 * 1024


_VMEM_LIMIT = _vmem_limit_bytes()


# ----------------------------------------------------------------------------
# Kernel 1: word_encoder forward   out = tanh(x @ W + b)
#   grid = (token_tiles, k_tiles); bf16 operands, f32 accumulate in VMEM scratch.
# ----------------------------------------------------------------------------
def _encoder_kernel(x_ref, w_ref, b_ref, o_ref, acc_ref):
    k = pl.program_id(1)

    @pl.when(k == 0)
    def _():
        acc_ref[...] = jnp.zeros_like(acc_ref)

    acc_ref[...] += jnp.dot(x_ref[...], w_ref[...],
                            preferred_element_type=jnp.float32)

    @pl.when(k == pl.num_programs(1) - 1)
    def _():
        # bias add + tanh stay in f32 (v5e VPU/EUP have no bf16 path anyway).
        o_ref[...] = jnp.tanh(acc_ref[...] + b_ref[...])


def word_encoder_forward(x, w, b, *, tm_max=256, tk_max=512):
    n, h = x.shape
    assert w.shape == (h, h) and b.shape == (h,)

    ho = _round_up(h, 128)                 # lane-dense output width
    tk = min(tk_max, ho)                   # contraction tile (multiple of 128)
    hk = _round_up(h, tk)                  # padded contraction depth
    tm = min(tm_max, _round_up(n, 16))     # token tile (bf16-sublane friendly)
    npad = _round_up(n, tm)

    # Pad + cast operands: bf16 on the MXU halves HBM traffic and VMEM footprint.
    x_p = jnp.zeros((npad, hk), jnp.bfloat16).at[:n, :h].set(x.astype(jnp.bfloat16))
    w_p = jnp.zeros((hk, ho), jnp.bfloat16).at[:h, :h].set(w.astype(jnp.bfloat16))
    b_p = jnp.zeros((1, ho), jnp.float32).at[0, :h].set(b.astype(jnp.float32))

    grid = (npad // tm, hk // tk)
    cost = pl.CostEstimate(
        flops=2 * npad * hk * ho,
        transcendentals=npad * ho,
        bytes_accessed=2 * npad * hk + 2 * hk * ho + 4 * ho + 4 * npad * ho)

    out = pl.pallas_call(
        _encoder_kernel,
        out_shape=jax.ShapeDtypeStruct((npad, ho), jnp.float32),
        grid_spec=pltpu.PrefetchScalarGridSpec(
            num_scalar_prefetch=0,
            grid=grid,
            in_specs=[
                pl.BlockSpec((tm, tk), lambda i, k: (i, k)),   # x tile
                pl.BlockSpec((tk, ho), lambda i, k: (k, 0)),   # W slab
                pl.BlockSpec((1, ho), lambda i, k: (0, 0)),    # bias (resident)
            ],
            out_specs=pl.BlockSpec((tm, ho), lambda i, k: (i, 0)),
            scratch_shapes=[pltpu.VMEM((tm, ho), jnp.float32)],
        ),
        compiler_params=pltpu.CompilerParams(
            dimension_semantics=("parallel", "arbitrary"),
            vmem_limit_bytes=_VMEM_LIMIT),
        cost_estimate=cost,
    )(x_p, w_p, b_p)
    return out[:n, :h]


# ----------------------------------------------------------------------------
# Kernel 2: get_emission softmax   probs = softmax(logits, axis=-1)
#   tiled over spans; label dim padded to 128 lanes with -1e30 (exp -> 0).
# ----------------------------------------------------------------------------
def _softmax_kernel(z_ref, p_ref):
    z = z_ref[...]
    m = jnp.max(z, axis=-1, keepdims=True)
    e = jnp.exp(z - m)
    denom = jnp.sum(e, axis=-1, keepdims=True)
    r = pl.reciprocal(denom, approx=True)      # EUP slot (nearly free)
    r = r * (2.0 - denom * r)                  # one Newton step -> f32 accuracy
    p_ref[...] = e * r


def emission_softmax(logits, *, ts_max=512):
    n, c = logits.shape
    cpad = _round_up(c, 128)
    ts = min(ts_max, _round_up(n, 8))
    npad = _round_up(n, ts)

    z = jnp.full((npad, cpad), -1e30, jnp.float32).at[:n, :c].set(
        logits.astype(jnp.float32))

    out = pl.pallas_call(
        _softmax_kernel,
        out_shape=jax.ShapeDtypeStruct((npad, cpad), jnp.float32),
        grid_spec=pltpu.PrefetchScalarGridSpec(
            num_scalar_prefetch=0,
            grid=(npad // ts,),
            in_specs=[pl.BlockSpec((ts, cpad), lambda i: (i, 0))],
            out_specs=pl.BlockSpec((ts, cpad), lambda i: (i, 0)),
        ),
        compiler_params=pltpu.CompilerParams(
            dimension_semantics=("parallel",),
            vmem_limit_bytes=_VMEM_LIMIT),
    )(z)
    return out[:n, :c]


# ----------------------------------------------------------------------------
# Kernel 3: span_accuracy(pred, gold) = mean(pred == gold)
#   tiled over rows; SMEM scalar accumulator; (1,1) SMEM scalar output.
# ----------------------------------------------------------------------------
def _span_acc_kernel(pred_ref, gold_ref, out_ref, sum_ref, *, inv_total):
    i = pl.program_id(0)

    @pl.when(i == 0)
    def _():
        sum_ref[0] = jnp.float32(0.0)

    eq = (pred_ref[...] == gold_ref[...]).astype(jnp.float32)
    sum_ref[0] = sum_ref[0] + jnp.sum(eq)

    @pl.when(i == pl.num_programs(0) - 1)
    def _():
        out_ref[0, 0] = sum_ref[0] * inv_total


def span_accuracy(pred, gold, *, tr_max=512):
    assert pred.shape == gold.shape
    n, s = pred.shape
    total = n * s
    spad = _round_up(s, 128)
    tr = min(tr_max, _round_up(n, 8))
    npad = _round_up(n, tr)

    # Distinct sentinels in the padded region so padded cells never match.
    p = jnp.full((npad, spad), -1, jnp.int32).at[:n, :s].set(pred.astype(jnp.int32))
    g = jnp.full((npad, spad), -2, jnp.int32).at[:n, :s].set(gold.astype(jnp.int32))

    kern = functools.partial(_span_acc_kernel, inv_total=1.0 / float(total))
    out = pl.pallas_call(
        kern,
        out_shape=jax.ShapeDtypeStruct((1, 1), jnp.float32),
        grid_spec=pltpu.PrefetchScalarGridSpec(
            num_scalar_prefetch=0,
            grid=(npad // tr,),
            in_specs=[
                pl.BlockSpec((tr, spad), lambda i: (i, 0)),
                pl.BlockSpec((tr, spad), lambda i: (i, 0)),
            ],
            out_specs=pl.BlockSpec(memory_space=pltpu.MemorySpace.SMEM),
            scratch_shapes=[pltpu.SMEM((1,), jnp.float32)],
        ),
        compiler_params=pltpu.CompilerParams(
            dimension_semantics=("arbitrary",),
            vmem_limit_bytes=_VMEM_LIMIT),
    )(p, g)
    # TODO(synk): like the PyTorch np.mean(pred == gold), this averages over
    # every element of the arrays given; padded sequences would need a mask.
    return out[0, 0]


# ----------------------------------------------------------------------------
# FewShotSpanModel (JAX side).  forward() of the original module is abstract;
# expose the encoder + the numeric pieces of the eval paths.
# ----------------------------------------------------------------------------
class FewShotSpanModelPallas:
    def __init__(self, hidden, num_labels, key):
        kw, kb = jax.random.split(key)
        # deterministic synthetic word-encoder params (nn.DataParallel wrapper
        # has no parameters of its own — only the wrapped encoder matters).
        self.enc_w = (jax.random.normal(kw, (hidden, hidden), jnp.float32)
                      / jnp.sqrt(jnp.float32(hidden)))
        self.enc_b = jax.random.normal(kb, (hidden,), jnp.float32) * 0.02
        self.num_labels = num_labels

    def encode(self, x_tokens):
        # word_encoder forward: [N_tokens, H] -> [N_tokens, H]
        return word_encoder_forward(x_tokens, self.enc_w, self.enc_b)

    def get_emission_probs(self, ep_logits):
        # numeric part of get_emission(): softmax over label axis.
        return emission_softmax(ep_logits)

    def span_accuracy(self, pred, gold):
        return span_accuracy(pred, gold)

    # TODO(synk): forward() is abstract in the original; merge_ment /
    # merge_entity / greedy_search / metrics_by_entity / *_eval are pure-Python
    # list & set post-processing with no tensor compute, so they are not ported.


if __name__ == "__main__":
    key = jax.random.PRNGKey(0)
    k_x, k_l, k_p, k_g, k_m = jax.random.split(key, 5)

    BATCH, SEQ, HIDDEN = 2, 8, 32
    N_TOKENS = BATCH * SEQ
    N_SPANS, N_LABELS = 8, 5

    model = FewShotSpanModelPallas(HIDDEN, N_LABELS, k_m)

    # word-encoder input (flattened token embeddings)
    x = jax.random.normal(k_x, (N_TOKENS, HIDDEN), jnp.float32)
    encoded = model.encode(x)

    # get_emission: softmax over span-classification logits
    ep_logits = jax.random.normal(k_l, (N_SPANS, N_LABELS), jnp.float32)
    probs = model.get_emission_probs(ep_logits)

    # span_accuracy
    pred = jax.random.randint(k_p, (BATCH, SEQ), 0, N_LABELS, dtype=jnp.int32)
    gold = jax.random.randint(k_g, (BATCH, SEQ), 0, N_LABELS, dtype=jnp.int32)
    acc = model.span_accuracy(pred, gold)

    jax.block_until_ready((encoded, probs, acc))

    # sanity checks vs plain-JAX references
    ref_enc_bf16 = jnp.tanh(
        jnp.dot(x.astype(jnp.bfloat16), model.enc_w.astype(jnp.bfloat16),
                preferred_element_type=jnp.float32) + model.enc_b)
    ref_enc_f32 = jnp.tanh(x @ model.enc_w + model.enc_b)
    ref_probs = jax.nn.softmax(ep_logits, axis=-1)
    ref_acc = jnp.mean((pred == gold).astype(jnp.float32))

    assert encoded.shape == (N_TOKENS, HIDDEN)
    assert probs.shape == (N_SPANS, N_LABELS)
    assert jnp.allclose(encoded, ref_enc_bf16, atol=1e-3), "encoder mismatch (bf16 ref)"
    assert jnp.allclose(encoded, ref_enc_f32, atol=5e-2), "encoder mismatch (f32 ref)"
    assert jnp.allclose(probs, ref_probs, atol=1e-4), "softmax mismatch"
    assert jnp.allclose(acc, ref_acc, atol=1e-6), "span_accuracy mismatch"

    print("KERNEL_OK")
</pallas_src>

<mosaic_0001>
module attributes {stable_mosaic.version = 11 : i64} {
  func.func @_encoder_kernel(%arg0: i32, %arg1: i32, %arg2: memref<16x128xbf16, #tpu.memory_space<vmem>>, %arg3: memref<128x128xbf16, #tpu.memory_space<vmem>>, %arg4: memref<1x128xf32, #tpu.memory_space<vmem>>, %arg5: memref<16x128xf32, #tpu.memory_space<vmem>>, %arg6: memref<16x128xf32, #tpu.memory_space<vmem>>) attributes {dimension_semantics = [#tpu.dimension_semantics<parallel>, #tpu.dimension_semantics<arbitrary>], iteration_bounds = array<i64: 1, 1>, scalar_prefetch = 0 : i64, scratch_operands = 1 : i64, tpu.core_type = #tpu.core_type<tc>, window_params = [{transform_indices = @transform_0, window_bounds = array<i64: 16, 128>}, {transform_indices = @transform_1, window_bounds = array<i64: 128, 128>}, {pipeline_mode = #tpu.pipeline_mode<synchronous>, transform_indices = @transform_2, window_bounds = array<i64: 1, 128>}, {transform_indices = @transform_3, window_bounds = array<i64: 16, 128>}]} {
    %c0_i32 = arith.constant 0 : i32
    %0 = arith.cmpi eq, %arg1, %c0_i32 : i32
    %1 = arith.extui %0 : i1 to i32
    %c0_i32_0 = arith.constant 0 : i32
    %2 = arith.cmpi ne, %1, %c0_i32_0 : i32
    scf.if %2 {
      %cst_10 = arith.constant 0.000000e+00 : f32
      %12 = vector.broadcast %cst_10 : f32 to vector<16x128xf32>
      %c0_11 = arith.constant 0 : index
      %c0_12 = arith.constant 0 : index
      %13 = vector.load %arg6[%c0_11, %c0_12] : memref<16x128xf32, #tpu.memory_space<vmem>>, vector<16x128xf32>
      tpu.vector_store %arg6[%c0_11, %c0_12], %12 {strides = array<i32>} : memref<16x128xf32, #tpu.memory_space<vmem>>, vector<16x128xf32>,
    } else {
    }
    %c0 = arith.constant 0 : index
    %c0_1 = arith.constant 0 : index
    %3 = vector.load %arg6[%c0, %c0_1] : memref<16x128xf32, #tpu.memory_space<vmem>>, vector<16x128xf32>
    %c0_2 = arith.constant 0 : index
    %c0_3 = arith.constant 0 : index
    %4 = vector.load %arg2[%c0_2, %c0_3] : memref<16x128xbf16, #tpu.memory_space<vmem>>, vector<16x128xbf16>
    %c0_4 = arith.constant 0 : index
    %c0_5 = arith.constant 0 : index
    %5 = vector.load %arg3[%c0_4, %c0_5] : memref<128x128xbf16, #tpu.memory_space<vmem>>, vector<128x128xbf16>
    %cst = arith.constant dense<0.000000e+00> : vector<16x128xf32>
    %6 = tpu.matmul %4, %5, %cst {dimension_numbers = #tpu.dot_dimension_numbers<[1], [0], [0], [1], [0, 0, 1, 1], [], []>} : vector<16x128xbf16>, vector<128x128xbf16>, vector<16x128xf32> -> vector<16x128xf32>
    %7 = arith.addf %3, %6 : vector<16x128xf32>
    %c0_6 = arith.constant 0 : index
    %c0_7 = arith.constant 0 : index
    %8 = vector.load %arg6[%c0_6, %c0_7] : memref<16x128xf32, #tpu.memory_space<vmem>>, vector<16x128xf32>
    tpu.vector_store %arg6[%c0_6, %c0_7], %7 {strides = array<i32>} : memref<16x128xf32, #tpu.memory_space<vmem>>, vector<16x128xf32>,
    %c0_i32_8 = arith.constant 0 : i32
    %9 = arith.cmpi eq, %arg1, %c0_i32_8 : i32
    %10 = arith.extui %9 : i1 to i32
    %c0_i32_9 = arith.constant 0 : i32
    %11 = arith.cmpi ne, %10, %c0_i32_9 : i32
    scf.if %11 {
      %c0_10 = arith.constant 0 : index
      %c0_11 = arith.constant 0 : index
      %12 = vector.load %arg6[%c0_10, %c0_11] : memref<16x128xf32, #tpu.memory_space<vmem>>, vector<16x128xf32>
      %c0_12 = arith.constant 0 : index
      %c0_13 = arith.constant 0 : index
      %13 = vector.load %arg4[%c0_12, %c0_13] : memref<1x128xf32, #tpu.memory_space<vmem>>, vector<1x128xf32>
      %14 = vector.broadcast %13 : vector<1x128xf32> to vector<16x128xf32>
      %15 = arith.addf %12, %14 : vector<16x128xf32>
      %16 = math.tanh %15 : vector<16x128xf32>
      %c0_14 = arith.constant 0 : index
      %c0_15 = arith.constant 0 : index
      %17 = vector.load %arg5[%c0_14, %c0_15] : memref<16x128xf32, #tpu.memory_space<vmem>>, vector<16x128xf32>
      tpu.vector_store %arg5[%c0_14, %c0_15], %16 {strides = array<i32>} : memref<16x128xf32, #tpu.memory_space<vmem>>, vector<16x128xf32>,
    } else {
    }
    return
  }
  func.func @transform_0(%arg0: i32, %arg1: i32) -> (i32, i32) {
    %c0_i32 = arith.constant 0 : i32
    return %arg0, %arg1 : i32, i32
  }
  func.func @transform_1(%arg0: i32, %arg1: i32) -> (i32, i32) {
    %c0_i32 = arith.constant 0 : i32
    %c0_i32_0 = arith.constant 0 : i32
    return %arg1, %c0_i32 : i32, i32
  }
  func.func @transform_2(%arg0: i32, %arg1: i32) -> (i32, i32) {
    %c0_i32 = arith.constant 0 : i32
    %c0_i32_0 = arith.constant 0 : i32
    %c0_i32_1 = arith.constant 0 : i32
    return %c0_i32, %c0_i32_0 : i32, i32
  }
  func.func @transform_3(%arg0: i32, %arg1: i32) -> (i32, i32) {
    %c0_i32 = arith.constant 0 : i32
    %c0_i32_0 = arith.constant 0 : i32
    return %arg0, %c0_i32 : i32, i32
  }
}

</mosaic_0001>

<llo_original>
// kernel: tpu_custom_call.1
$region0: #{tpu_custom_call.1}
  #allocation0 [shape = 'u32[]', space=smem, size = 0x4, offset = 0x4, fixed_abs, tag = 'smem constant byte address 0x4 - core index']
  #allocation1 [shape = 'u32[144,128]{1,0:T(1,128)}', space=vmem, size = 0x12000, scoped, tag = 'internal scratch']
  #allocation2 [shape = 'f32[16,128]{1,0:T(8,128)}', space=vmem, size = 0x2000, scoped, tag = 'scratch operand']
  %s0 = inlined_call_operand.hbm [shape: bf16[16,128], index: 0, kind: input, shape index: {}]
  %s1 = inlined_call_operand.hbm [shape: bf16[128,128], index: 1, kind: input, shape index: {}]
  %s2 = inlined_call_operand.vmem [shape: f32[1,128], index: 2, kind: input, shape index: {}]
  %s3 = inlined_call_operand.hbm [shape: f32[16,128], index: 3, kind: output, shape index: {}]
  %s4 = sld [smem:[#allocation0]]
  $region38: #{tpu_custom_call.1} parent=0
    _
  %s6 = ssub.s32 1, %s4
  %s7 = scalar_select 0, %s6, %s4
  $region1: #{tpu_custom_call.1} parent=0
    #allocation3 [shape = 'u8[4096]{0}', space=vmem, size = 0x1000, scoped, tag = 'input window, operand 0, single buffered']
    #allocation4 [shape = 's32[1]{0}', space=sflag, size = 0x4, scoped, tag = 'scoped memory for tpu_custom_call.1']
    #allocation5 [shape = 's32[1]{0}', space=sflag, size = 0x4, scoped, tag = 'scoped memory for tpu_custom_call.1']
    #allocation6 [shape = 'u8[32768]{0}', space=vmem, size = 0x8000, scoped, tag = 'input window, operand 1, single buffered']
    #allocation7 [shape = 's32[1]{0}', space=sflag, size = 0x4, scoped, tag = 'scoped memory for tpu_custom_call.1']
    #allocation8 [shape = 'u8[8192]{0}', space=vmem, size = 0x2000, scoped, tag = 'output window, operand 0, single buffered']
    %8 = vsyncpa [#allocation4], 0
    %9 = vsyncpa [#allocation7], 0
    %10 = vsyncpa [#allocation5], 0
    // Predicated region
    $region2: #{tpu_custom_call.1} parent=1 // pred_check
      _
    $region3: #{tpu_custom_call.1} parent=1 // pred_check_branch
      %12 = sbr.rel (0) target = $region5
    $region4: #{tpu_custom_call.1} parent=1 // pred_region
      %s14 = ssub.s32 128, 128
      %15 = vsyncadd [#allocation4], %s14
      %s16 = sshll.u32 [#allocation3], 4
      %s17 = int_to_ptr.vmem [resolvable:$true] %s16
      %22 = dma.hbm_to_vmem [thread:$0]  %s0, 128, %s17, [#allocation4], 64, 64, 4
    $region5: #{tpu_custom_call.1} parent=1 // pred_fallthru
      _
    // Predicated region
    $region6: #{tpu_custom_call.1} parent=1 // pred_check
      _
    $region7: #{tpu_custom_call.1} parent=1 // pred_check_branch
      %24 = sbr.rel (0) target = $region9
    $region8: #{tpu_custom_call.1} parent=1 // pred_region
      %s26 = ssub.s32 1024, 1024
      %27 = vsyncadd [#allocation7], %s26
      %s28 = sshll.u32 [#allocation6], 4
      %s29 = int_to_ptr.vmem [resolvable:$true] %s28
      %34 = dma.hbm_to_vmem [thread:$0]  %s1, 1024, %s29, [#allocation7], 64, 64, 4
    $region9: #{tpu_custom_call.1} parent=1 // pred_fallthru
      _
    // Predicated region
    $region10: #{tpu_custom_call.1} parent=1 // pred_check
      _
    $region11: #{tpu_custom_call.1} parent=1 // pred_check_branch
      %36 = sbr.rel (0) target = $region13
    $region12: #{tpu_custom_call.1} parent=1 // pred_region
      _
    $region13: #{tpu_custom_call.1} parent=1 // pred_fallthru
      _
    // Predicated region
    $region14: #{tpu_custom_call.1} parent=1 // pred_check
      _
    $region15: #{tpu_custom_call.1} parent=1 // pred_check_branch
      %38 = sbr.rel (0) target = $region17
    $region16: #{tpu_custom_call.1} parent=1 // pred_region
      %39 = dma.done [#allocation4], 128
    $region17: #{tpu_custom_call.1} parent=1 // pred_fallthru
      _
    // Predicated region
    $region18: #{tpu_custom_call.1} parent=1 // pred_check
      _
    $region19: #{tpu_custom_call.1} parent=1 // pred_check_branch
      %41 = sbr.rel (0) target = $region21
    $region20: #{tpu_custom_call.1} parent=1 // pred_region
      %42 = dma.done [#allocation7], 1024
    $region21: #{tpu_custom_call.1} parent=1 // pred_fallthru
      _
    %p44 = scmp.eq.s32.totalorder 0, 0
    // Predicated region
    $region22: #{tpu_custom_call.1} parent=1 // pred_check
      %p45 = pneg %p44
    $region23: #{tpu_custom_call.1} parent=1 // pred_check_branch
      %47 = sbr.rel (%p45) target = $region25
    $region24: #{tpu_custom_call.1} parent=1 // pred_region
      %48 = vst [vmem:[#allocation2] sm:$0xff] 0.0
      %49 = vst [vmem:[#allocation2 + $0x8] sm:$0xff] 0.0
    $region25: #{tpu_custom_call.1} parent=1 // pred_fallthru
      _
    %v50 = vld [vmem:[#allocation2] sm:$0xff]
    %v51 = vld [vmem:[#allocation2 + $0x8] sm:$0xff]
    %v52 = vld [vmem:[#allocation3] sm:$0xf]
    %v53 = vld [vmem:[#allocation3 + $0x4] sm:$0xf]
    %v54 = vld [vmem:[#allocation6] sm:$0xf]
    %v55 = vld [vmem:[#allocation6 + $0x4] sm:$0xf]
    %v56 = vld [vmem:[#allocation6 + $0x8] sm:$0xf]
    %v57 = vld [vmem:[#allocation6 + $0xc] sm:$0xf]
    %v58 = vld [vmem:[#allocation6 + $0x10] sm:$0xf]
    %v59 = vld [vmem:[#allocation6 + $0x14] sm:$0xf]
    %v60 = vld [vmem:[#allocation6 + $0x18] sm:$0xf]
    %v61 = vld [vmem:[#allocation6 + $0x1c] sm:$0xf]
    %v62 = vld [vmem:[#allocation6 + $0x20] sm:$0xf]
    %v63 = vld [vmem:[#allocation6 + $0x24] sm:$0xf]
    %v64 = vld [vmem:[#allocation6 + $0x28] sm:$0xf]
    %v65 = vld [vmem:[#allocation6 + $0x2c] sm:$0xf]
    %v66 = vld [vmem:[#allocation6 + $0x30] sm:$0xf]
    %v67 = vld [vmem:[#allocation6 + $0x34] sm:$0xf]
    %v68 = vld [vmem:[#allocation6 + $0x38] sm:$0xf]
    %v69 = vld [vmem:[#allocation6 + $0x3c] sm:$0xf]
    %v72 = vunpack.c.l.b16 %v52
    %v73 = vunpack.c.l.b16 %v53
    %v74 = vpack.c.b16 %v73, %v72
    %v92 = vunpack.c.l.b16 %v54
    %v93 = vunpack.c.l.b16 %v55
    %v94 = vunpack.c.l.b16 %v56
    %v95 = vunpack.c.l.b16 %v57
    %v96 = vunpack.c.l.b16 %v58
    %v97 = vunpack.c.l.b16 %v59
    %v98 = vunpack.c.l.b16 %v60
    %v99 = vunpack.c.l.b16 %v61
    %v100 = vunpack.c.l.b16 %v62
    %v101 = vunpack.c.l.b16 %v63
    %v102 = vunpack.c.l.b16 %v64
    %v103 = vunpack.c.l.b16 %v65
    %v104 = vunpack.c.l.b16 %v66
    %v105 = vunpack.c.l.b16 %v67
    %v106 = vunpack.c.l.b16 %v68
    %v107 = vunpack.c.l.b16 %v69
    %v108 = vpack.c.b16 %v93, %v92
    %v109 = vpack.c.b16 %v95, %v94
    %v110 = vpack.c.b16 %v97, %v96
    %v111 = vpack.c.b16 %v99, %v98
    %v112 = vpack.c.b16 %v101, %v100
    %v113 = vpack.c.b16 %v103, %v102
    %v114 = vpack.c.b16 %v105, %v104
    %v115 = vpack.c.b16 %v107, %v106
    %124 = vmatprep.subr.bf16.mxu0 0
    %125 = vmatpush1.bf16.msra.mxu0 %v108
    %126 = vmatprep.subr.bf16.mxu0 0
    %127 = vmatpush1.bf16.msra.mxu0 %v109
    %128 = vmatprep.subr.bf16.mxu0 0
    %129 = vmatpush1.bf16.msra.mxu0 %v110
    %130 = vmatprep.subr.bf16.mxu0 0
    %131 = vmatpush1.bf16.msra.mxu0 %v111
    %132 = vmatprep.subr.bf16.mxu0 0
    %133 = vmatpush1.bf16.msra.mxu0 %v112
    %134 = vmatprep.subr.bf16.mxu0 0
    %135 = vmatpush1.bf16.msra.mxu0 %v113
    %136 = vmatprep.subr.bf16.mxu0 0
    %137 = vmatpush1.bf16.msra.mxu0 %v114
    %138 = vmatprep.subr.bf16.mxu0 0
    %139 = vmatpush1.bf16.msra.mxu0 %v115
    %140 = vmatprep.subr.bf16.mxu0 0
    %141 = vmatpush1.bf16.msra.mxu0 0
    %142 = vmatprep.subr.bf16.mxu0 0
    %143 = vmatpush1.bf16.msra.mxu0 0
    %144 = vmatprep.subr.bf16.mxu0 0
    %145 = vmatpush1.bf16.msra.mxu0 0
    %146 = vmatprep.subr.bf16.mxu0 0
    %147 = vmatpush1.bf16.msra.mxu0 0
    %148 = vmatprep.subr.bf16.mxu0 0
    %149 = vmatpush1.bf16.msra.mxu0 0
    %150 = vmatprep.subr.bf16.mxu0 0
    %151 = vmatpush1.bf16.msra.mxu0 0
    %152 = vmatprep.subr.bf16.mxu0 0
    %153 = vmatpush1.bf16.msra.mxu0 0
    %154 = vmatprep.subr.bf16.mxu0 0
    %155 = vmatpush1.bf16.msra.mxu0 0
    %156 = vmatprep.mubr.bf16.mxu0 0
    %157 = vmatmul.mubr.bf16.gmra.mrb[0].mxu0 %v74
    %v158 = vpop.f32.mrb[0].mxu0
    %v159 = vadd.f32 0.0, %v158
    %v160 = vpop.f32.mrb[0].mxu0
    %v161 = vpop.f32.mrb[0].mxu0
    %v162 = vadd.f32 0.0, %v161
    %v163 = vpop.f32.mrb[0].mxu0
    %164 = vdwg.mxu0
    %v165 = vadd.f32 %v50, %v159
    %v166 = vadd.f32 %v51, %v162
    %167 = vst [vmem:[#allocation2] sm:$0xff] %v165
    %168 = vst [vmem:[#allocation2 + $0x8] sm:$0xff] %v166
    // Predicated region
    $region26: #{tpu_custom_call.1} parent=1 // pred_check
      %p169 = pneg %p44
    $region27: #{tpu_custom_call.1} parent=1 // pred_check_branch
      %171 = sbr.rel (%p169) target = $region29
    $region28: #{tpu_custom_call.1} parent=1 // pred_region
      %v172 = vld [vmem:[#allocation2] sm:$0xff]
      %v173 = vld [vmem:[#allocation2 + $0x8] sm:$0xff]
      %v174 = vld [vmem:[%s2] sm:$0x1]
      %v176 = vlaneseq
      %v177 = vshrl.u32 %v176, 7
      %v178 = vsub.s32 0, %v177
      %v179 = vrot.slane %v174, %v178
      %v181 = vadd.f32 %v172, %v179
      %v182 = vadd.f32 %v173, %v179
      %v183 = vtanh.pop %v181
      %v184 = vtanh.pop %v182
      %185 = vst [vmem:[#allocation8] sm:$0xff] %v183
      %186 = vst [vmem:[#allocation8 + $0x8] sm:$0xff] %v184
    $region29: #{tpu_custom_call.1} parent=1 // pred_fallthru
      _
    // Predicated region
    $region30: #{tpu_custom_call.1} parent=1 // pred_check
      _
    $region31: #{tpu_custom_call.1} parent=1 // pred_check_branch
      %188 = sbr.rel (0) target = $region33
    $region32: #{tpu_custom_call.1} parent=1 // pred_region
      %s190 = ssub.s32 256, 256
      %191 = vsyncadd [#allocation5], %s190
      %s192 = sshll.u32 [#allocation8], 4
      %s193 = int_to_ptr.vmem [resolvable:$true] %s192
      %198 = dma.vmem_to_hbm [thread:$0]  %s193, 256, %s3, [#allocation5], 128, 128, 8
    $region33: #{tpu_custom_call.1} parent=1 // pred_fallthru
      _
    // Predicated region
    $region34: #{tpu_custom_call.1} parent=1 // pred_check
      _
    $region35: #{tpu_custom_call.1} parent=1 // pred_check_branch
      %200 = sbr.rel (0) target = $region37
    $region36: #{tpu_custom_call.1} parent=1 // pred_region
      %201 = dma.done [#allocation5], 256
    $region37: #{tpu_custom_call.1} parent=1 // pred_fallthru
      _
    %202 = vsyncpa [#allocation4], 1
    %203 = vsyncpa [#allocation7], 1
    %204 = vsyncpa [#allocation5], 1

</llo_original>
